<compile_context>
chip_gen: v5e
topology: v5e:2x2
jax: 0.10.0
libtpu: 0.0.40
codegen_flags: <defaults>
</compile_context>

<pallas_src>
import functools

import jax
import jax.numpy as jnp
from jax import lax
from jax.experimental import pallas as pl
from jax.experimental.pallas import tpu as pltpu

IN_DIM = 10
HID_DIM = 20
OUT_DIM = 1

_INV_SQRT2 = 0.7071067811865476  # 1/sqrt(2), for exact (erf) GELU


def _round_up(a, b):
    return (a + b - 1) // b * b


def mlp_kernel(x_ref, w1t_ref, b1_ref, w2t_ref, b2_ref, o_ref):
    # x_ref:  [TILE, IN]   streamed batch tile, native row-major layout
    # w1t:    [HID, IN]    b1: [HID, 1]
    # w2t:    [OUT, HID]   b2: [OUT, 1]
    # o_ref:  [OUT, TILE]  lane-dense output (batch on the 128-lane axis)
    x = x_ref[...]

    # hT = W1^T . x^T -> [HID, TILE]; contraction over IN on both operands.
    # Mosaic performs the x-tile transpose on the (otherwise idle) XLU slot.
    h = lax.dot_general(
        w1t_ref[...], x,
        dimension_numbers=(((1,), (1,)), ((), ())),
        precision=lax.Precision.HIGHEST,
        preferred_element_type=jnp.float32)                  # [HID, TILE]
    h = h + b1_ref[...]                                      # broadcast over lanes

    # Exact GELU (erf-based), matches torch.nn.GELU default.
    # (Mosaic strip-mines this elementwise chain over vreg-sized lane chunks.)
    h = 0.5 * h * (1.0 + lax.erf(h * _INV_SQRT2))

    # yT = W2^T . hT -> lane-dense [OUT, TILE] on the MXU.
    y = lax.dot_general(
        w2t_ref[...], h,
        dimension_numbers=(((1,), (0,)), ((), ())),
        precision=lax.Precision.HIGHEST,
        preferred_element_type=jnp.float32)                  # [OUT, TILE]
    o_ref[...] = y + b2_ref[...]


@functools.partial(jax.jit, static_argnames=("tile_n",))
def test_network_forward(x, w1, b1, w2, b2, tile_n=8192):
    """x: [N, IN_DIM] float32 -> [N, OUT_DIM] float32."""
    n = x.shape[0]
    # Big tiles to amortize per-grid-step overhead, but keep >= 2 grid steps
    # when the batch allows it (v7x megacore sharding of the batch axis).
    tile = min(tile_n, max(128, _round_up((n + 1) // 2, 128)))
    n_pad = _round_up(n, tile)
    grid = (n_pad // tile,)

    # Tiny weight reshapes only (no transpose/pad of the big x operand).
    w1t = w1.T                       # [HID, IN]
    b1c = b1.reshape(HID_DIM, 1)     # [HID, 1]
    w2t = w2.T                       # [OUT, HID]
    b2c = b2.reshape(OUT_DIM, 1)     # [OUT, 1]

    yt = pl.pallas_call(
        mlp_kernel,
        out_shape=jax.ShapeDtypeStruct((OUT_DIM, n_pad), jnp.float32),
        grid=grid,
        in_specs=[
            # Streamed operand: one batch tile per grid step (rows past N in
            # the last tile are masked/garbage; their columns are sliced off).
            pl.BlockSpec((tile, IN_DIM), lambda i: (i, 0)),
            # Weights / biases: constant index_map -> resident in VMEM.
            pl.BlockSpec((HID_DIM, IN_DIM), lambda i: (0, 0)),
            pl.BlockSpec((HID_DIM, 1), lambda i: (0, 0)),
            pl.BlockSpec((OUT_DIM, HID_DIM), lambda i: (0, 0)),
            pl.BlockSpec((OUT_DIM, 1), lambda i: (0, 0)),
        ],
        out_specs=pl.BlockSpec((OUT_DIM, tile), lambda i: (0, i)),
        compiler_params=pltpu.CompilerParams(
            dimension_semantics=("parallel",),   # megacore-shard the batch axis
            # Headroom for double-buffered x blocks + intermediates; safe on
            # v5e/v6e (128 MiB physical) and v7x (64 MiB physical).
            vmem_limit_bytes=32 * 1024 * 1024,
        ),
    )(x, w1t, b1c, w2t, b2c)

    # Back to [N, OUT_DIM], dropping lane padding (cheap: output is tiny).
    return yt[:, :n].T


def init_params(key):
    # Deterministic init mimicking nn.Linear: U(-1/sqrt(fan_in), 1/sqrt(fan_in))
    k1, k2, k3, k4 = jax.random.split(key, 4)
    bound1 = 1.0 / jnp.sqrt(IN_DIM)
    bound2 = 1.0 / jnp.sqrt(HID_DIM)
    w1 = jax.random.uniform(k1, (IN_DIM, HID_DIM), jnp.float32, -bound1, bound1)
    b1 = jax.random.uniform(k2, (HID_DIM,), jnp.float32, -bound1, bound1)
    w2 = jax.random.uniform(k3, (HID_DIM, OUT_DIM), jnp.float32, -bound2, bound2)
    b2 = jax.random.uniform(k4, (OUT_DIM,), jnp.float32, -bound2, bound2)
    return w1, b1, w2, b2


def _reference(x, w1, b1, w2, b2):
    hp = lax.Precision.HIGHEST
    h = jnp.dot(x, w1, precision=hp) + b1
    h = 0.5 * h * (1.0 + lax.erf(h * _INV_SQRT2))
    return jnp.dot(h, w2, precision=hp) + b2


if __name__ == "__main__":
    key = jax.random.PRNGKey(0)
    kx, kp = jax.random.split(key)

    batch = 8
    x = jax.random.normal(kx, (batch, IN_DIM), jnp.float32)
    w1, b1, w2, b2 = init_params(kp)

    out = test_network_forward(x, w1, b1, w2, b2)
    jax.block_until_ready(out)

    ref = _reference(x, w1, b1, w2, b2)
    assert out.shape == (batch, OUT_DIM)
    assert jnp.allclose(out, ref, atol=1e-5, rtol=1e-5), "mismatch vs reference"

    # Larger, non-multiple-of-tile batch exercises the multi-step grid and the
    # masked boundary tile (this is where the tiling/layout changes pay off).
    big_n = 3000
    xb = jax.random.normal(jax.random.PRNGKey(1), (big_n, IN_DIM), jnp.float32)
    out_b = test_network_forward(xb, w1, b1, w2, b2)
    jax.block_until_ready(out_b)
    ref_b = _reference(xb, w1, b1, w2, b2)
    assert out_b.shape == (big_n, OUT_DIM)
    assert jnp.allclose(out_b, ref_b, atol=1e-5, rtol=1e-5), "mismatch (tiled path)"

    print("KERNEL_OK")
</pallas_src>

<mosaic_0001>
module attributes {stable_mosaic.version = 11 : i64} {
  func.func @mlp_kernel(%arg0: i32, %arg1: memref<128x10xf32, #tpu.memory_space<vmem>>, %arg2: memref<20x10xf32, #tpu.memory_space<vmem>>, %arg3: memref<20x1xf32, #tpu.memory_space<vmem>>, %arg4: memref<1x20xf32, #tpu.memory_space<vmem>>, %arg5: memref<1x1xf32, #tpu.memory_space<vmem>>, %arg6: memref<1x128xf32, #tpu.memory_space<vmem>>) attributes {dimension_semantics = [#tpu.dimension_semantics<parallel>], iteration_bounds = array<i64: 1>, scalar_prefetch = 0 : i64, scratch_operands = 0 : i64, tpu.core_type = #tpu.core_type<tc>, window_params = [{transform_indices = @transform_0, window_bounds = array<i64: 128, 10>}, {pipeline_mode = #tpu.pipeline_mode<synchronous>, transform_indices = @transform_1, window_bounds = array<i64: 20, 10>}, {pipeline_mode = #tpu.pipeline_mode<synchronous>, transform_indices = @transform_2, window_bounds = array<i64: 20, 1>}, {pipeline_mode = #tpu.pipeline_mode<synchronous>, transform_indices = @transform_3, window_bounds = array<i64: 1, 20>}, {pipeline_mode = #tpu.pipeline_mode<synchronous>, transform_indices = @transform_4, window_bounds = array<i64: 1, 1>}, {transform_indices = @transform_5, window_bounds = array<i64: 1, 128>}]} {
    %c0 = arith.constant 0 : index
    %c0_0 = arith.constant 0 : index
    %0 = vector.load %arg1[%c0, %c0_0] : memref<128x10xf32, #tpu.memory_space<vmem>>, vector<128x10xf32>
    %c0_1 = arith.constant 0 : index
    %c0_2 = arith.constant 0 : index
    %1 = vector.load %arg2[%c0_1, %c0_2] : memref<20x10xf32, #tpu.memory_space<vmem>>, vector<20x10xf32>
    %cst = arith.constant dense<0.000000e+00> : vector<20x128xf32>
    %2 = tpu.matmul %1, %0, %cst {dimension_numbers = #tpu.dot_dimension_numbers<[1], [1], [0], [0], [0, 0, 1, 0], [], []>, precision = #tpu.contract_precision<fp32>} : vector<20x10xf32>, vector<128x10xf32>, vector<20x128xf32> -> vector<20x128xf32>
    %c0_3 = arith.constant 0 : index
    %c0_4 = arith.constant 0 : index
    %3 = vector.load %arg3[%c0_3, %c0_4] : memref<20x1xf32, #tpu.memory_space<vmem>>, vector<20x1xf32>
    %4 = vector.broadcast %3 : vector<20x1xf32> to vector<20x128xf32>
    %5 = arith.addf %2, %4 : vector<20x128xf32>
    %cst_5 = arith.constant 5.000000e-01 : f32
    %6 = vector.broadcast %cst_5 : f32 to vector<20x128xf32>
    %7 = arith.mulf %6, %5 : vector<20x128xf32>
    %cst_6 = arith.constant 0.707106769 : f32
    %8 = vector.broadcast %cst_6 : f32 to vector<20x128xf32>
    %9 = arith.mulf %5, %8 : vector<20x128xf32>
    %10 = math.erf %9 : vector<20x128xf32>
    %cst_7 = arith.constant 1.000000e+00 : f32
    %11 = vector.broadcast %cst_7 : f32 to vector<20x128xf32>
    %12 = arith.addf %11, %10 : vector<20x128xf32>
    %13 = arith.mulf %7, %12 : vector<20x128xf32>
    %c0_8 = arith.constant 0 : index
    %c0_9 = arith.constant 0 : index
    %14 = vector.load %arg4[%c0_8, %c0_9] : memref<1x20xf32, #tpu.memory_space<vmem>>, vector<1x20xf32>
    %cst_10 = arith.constant dense<0.000000e+00> : vector<1x128xf32>
    %15 = tpu.matmul %14, %13, %cst_10 {dimension_numbers = #tpu.dot_dimension_numbers<[1], [0], [0], [1], [0, 0, 1, 1], [], []>, precision = #tpu.contract_precision<fp32>} : vector<1x20xf32>, vector<20x128xf32>, vector<1x128xf32> -> vector<1x128xf32>
    %c0_11 = arith.constant 0 : index
    %c0_12 = arith.constant 0 : index
    %16 = vector.load %arg5[%c0_11, %c0_12] : memref<1x1xf32, #tpu.memory_space<vmem>>, vector<1x1xf32>
    %17 = vector.broadcast %16 : vector<1x1xf32> to vector<1x128xf32>
    %18 = arith.addf %15, %17 : vector<1x128xf32>
    %c0_13 = arith.constant 0 : index
    %c0_14 = arith.constant 0 : index
    %19 = vector.load %arg6[%c0_13, %c0_14] : memref<1x128xf32, #tpu.memory_space<vmem>>, vector<1x128xf32>
    tpu.vector_store %arg6[%c0_13, %c0_14], %18 {strides = array<i32>} : memref<1x128xf32, #tpu.memory_space<vmem>>, vector<1x128xf32>,
    return
  }
  func.func @transform_0(%arg0: i32) -> (i32, i32) {
    %c0_i32 = arith.constant 0 : i32
    %c0_i32_0 = arith.constant 0 : i32
    return %arg0, %c0_i32 : i32, i32
  }
  func.func @transform_1(%arg0: i32) -> (i32, i32) {
    %c0_i32 = arith.constant 0 : i32
    %c0_i32_0 = arith.constant 0 : i32
    %c0_i32_1 = arith.constant 0 : i32
    return %c0_i32, %c0_i32_0 : i32, i32
  }
  func.func @transform_2(%arg0: i32) -> (i32, i32) {
    %c0_i32 = arith.constant 0 : i32
    %c0_i32_0 = arith.constant 0 : i32
    %c0_i32_1 = arith.constant 0 : i32
    return %c0_i32, %c0_i32_0 : i32, i32
  }
  func.func @transform_3(%arg0: i32) -> (i32, i32) {
    %c0_i32 = arith.constant 0 : i32
    %c0_i32_0 = arith.constant 0 : i32
    %c0_i32_1 = arith.constant 0 : i32
    return %c0_i32, %c0_i32_0 : i32, i32
  }
  func.func @transform_4(%arg0: i32) -> (i32, i32) {
    %c0_i32 = arith.constant 0 : i32
    %c0_i32_0 = arith.constant 0 : i32
    %c0_i32_1 = arith.constant 0 : i32
    return %c0_i32, %c0_i32_0 : i32, i32
  }
  func.func @transform_5(%arg0: i32) -> (i32, i32) {
    %c0_i32 = arith.constant 0 : i32
    %c0_i32_0 = arith.constant 0 : i32
    return %c0_i32, %arg0 : i32, i32
  }
}

</mosaic_0001>

<llo_original>
// kernel: test_network_forward.1
$region0: #{test_network_forward.1}
  #allocation0 [shape = 'u32[]', space=smem, size = 0x4, offset = 0x4, fixed_abs, tag = 'smem constant byte address 0x4 - core index']
  #allocation1 [shape = 'u32[72,128]{1,0:T(1,128)}', space=vmem, size = 0x9000, scoped, tag = 'internal scratch']
  #allocation2 [shape = 'f32[1,1]{1,0:T(1,128)S(1)}', space=vmem, size = 0x200, scoped, tag = 'scoped memory for test_network_forward.1']
  %s0 = inlined_call_operand.vmem [shape: f32[8,10], index: 0, kind: input, shape index: {}]
  %s1 = inlined_call_operand.vmem [shape: f32[20,10], index: 1, kind: input, shape index: {}]
  %s2 = inlined_call_operand.vmem [shape: f32[20,1], index: 2, kind: input, shape index: {}]
  %s3 = inlined_call_operand.vmem [shape: f32[1,20], index: 3, kind: input, shape index: {}]
  %s4 = inlined_call_operand.<no memory space> [shape: f32[1,1], index: 4, kind: input, shape index: {}]
  %s5 = inlined_call_operand.vmem [shape: f32[1,128], index: 5, kind: output, shape index: {}]
  %s6 = sld [smem:[#allocation0]]
  $region30: #{test_network_forward.1} parent=0
    _
  %s8 = ssub.s32 1, %s6
  %s9 = scalar_select 0, %s8, %s6
  %v10 = vstv %s4
  %11 = vst [vmem:[#allocation2] sm:$0x1] %v10
  // Predicated region
  $region2: #{test_network_forward.1} parent=0 // pred_check
    _
  $region3: #{test_network_forward.1} parent=0 // pred_check_branch
    %13 = sbr.rel (0) target = $region5
  $region4: #{test_network_forward.1} parent=0 // pred_region
    _
  $region5: #{test_network_forward.1} parent=0 // pred_fallthru
    _
  // Predicated region
  $region6: #{test_network_forward.1} parent=0 // pred_check
    _
  $region7: #{test_network_forward.1} parent=0 // pred_check_branch
    %15 = sbr.rel (0) target = $region9
  $region8: #{test_network_forward.1} parent=0 // pred_region
    _
  $region9: #{test_network_forward.1} parent=0 // pred_fallthru
    _
  // Predicated region
  $region10: #{test_network_forward.1} parent=0 // pred_check
    _
  $region11: #{test_network_forward.1} parent=0 // pred_check_branch
    %17 = sbr.rel (0) target = $region13
  $region12: #{test_network_forward.1} parent=0 // pred_region
    _
  $region13: #{test_network_forward.1} parent=0 // pred_fallthru
    _
  // Predicated region
  $region14: #{test_network_forward.1} parent=0 // pred_check
    _
  $region15: #{test_network_forward.1} parent=0 // pred_check_branch
    %19 = sbr.rel (0) target = $region17
  $region16: #{test_network_forward.1} parent=0 // pred_region
    _
  $region17: #{test_network_forward.1} parent=0 // pred_fallthru
    _
  // Predicated region
  $region18: #{test_network_forward.1} parent=0 // pred_check
    _
  $region19: #{test_network_forward.1} parent=0 // pred_check_branch
    %21 = sbr.rel (0) target = $region21
  $region20: #{test_network_forward.1} parent=0 // pred_region
    _
  $region21: #{test_network_forward.1} parent=0 // pred_fallthru
    _
  %v22 = vld [vmem:[%s0] sm:$0xff]
  %v23 = vld [vmem:[%s0 + $0x8] sm:$0xff]
  %v24 = vld [vmem:[%s0 + $0x10] sm:$0xff]
  %v25 = vld [vmem:[%s0 + $0x18] sm:$0xff]
  %v26 = vld [vmem:[%s0 + $0x20] sm:$0xff]
  %v27 = vld [vmem:[%s0 + $0x28] sm:$0xff]
  %v28 = vld [vmem:[%s0 + $0x30] sm:$0xff]
  %v29 = vld [vmem:[%s0 + $0x38] sm:$0xff]
  %v30 = vld [vmem:[%s0 + $0x40] sm:$0xff]
  %v31 = vld [vmem:[%s0 + $0x48] sm:$0xff]
  %v32 = vld [vmem:[%s0 + $0x50] sm:$0xff]
  %v33 = vld [vmem:[%s0 + $0x58] sm:$0xff]
  %v34 = vld [vmem:[%s0 + $0x60] sm:$0xff]
  %v35 = vld [vmem:[%s0 + $0x68] sm:$0xff]
  %v36 = vld [vmem:[%s0 + $0x70] sm:$0xff]
  %v37 = vld [vmem:[%s0 + $0x78] sm:$0xff]
  %v38 = vld [vmem:[%s1] sm:$0xff]
  %v39 = vld [vmem:[%s1 + $0x8] sm:$0xff]
  %v40 = vld [vmem:[%s1 + $0x10] sm:$0xf]
  %v41 = vld [vmem:[%s2] sm:$0xff]
  %v42 = vld [vmem:[%s2 + $0x8] sm:$0xff]
  %v43 = vld [vmem:[%s2 + $0x10] sm:$0xf]
  %45 = vset.pattern.permute.xlu0 0
  %46 = vperm.xlu0 %45, %v41
  %v47 = vpop.permute.xlu0 %46
  %50 = vset.pattern.permute.xlu0 0
  %51 = vperm.xlu0 %50, %v42
  %v52 = vpop.permute.xlu0 %51
  %55 = vset.pattern.permute.xlu0 0
  %56 = vperm.xlu0 %55, %v43
  %v57 = vpop.permute.xlu0 %56
  %vm59 = vcmask 80896
  %v61 = vsel %vm59, %v38, 0
  %v64 = vsel %vm59, %v39, 0
  %v67 = vsel %vm59, %v40, 0
  %v70 = vsel %vm59, %v22, 0
  %v73 = vsel %vm59, %v23, 0
  %v76 = vsel %vm59, %v24, 0
  %v79 = vsel %vm59, %v25, 0
  %v82 = vsel %vm59, %v26, 0
  %v85 = vsel %vm59, %v27, 0
  %v88 = vsel %vm59, %v28, 0
  %v91 = vsel %vm59, %v29, 0
  %v94 = vsel %vm59, %v30, 0
  %v97 = vsel %vm59, %v31, 0
  %v100 = vsel %vm59, %v32, 0
  %v103 = vsel %vm59, %v33, 0
  %v106 = vsel %vm59, %v34, 0
  %v109 = vsel %vm59, %v35, 0
  %v112 = vsel %vm59, %v36, 0
  %v115 = vsel %vm59, %v37, 0
  %v117 = vand.u32 %v115, 4294901760
  %118 = vmatpush.xpose.msra.mxu0 %v117
  %v119 = vand.u32 %v112, 4294901760
  %120 = vmatpush.xpose.msra.mxu0 %v119
  %v121 = vand.u32 %v109, 4294901760
  %122 = vmatpush.xpose.msra.mxu0 %v121
  %v123 = vand.u32 %v106, 4294901760
  %124 = vmatpush.xpose.msra.mxu0 %v123
  %v125 = vand.u32 %v103, 4294901760
  %126 = vmatpush.xpose.msra.mxu0 %v125
  %v127 = vand.u32 %v100, 4294901760
  %128 = vmatpush.xpose.msra.mxu0 %v127
  %v129 = vand.u32 %v97, 4294901760
  %130 = vmatpush.xpose.msra.mxu0 %v129
  %v131 = vand.u32 %v94, 4294901760
  %132 = vmatpush.xpose.msra.mxu0 %v131
  %v133 = vand.u32 %v91, 4294901760
  %134 = vmatpush.xpose.msra.mxu0 %v133
  %v135 = vand.u32 %v88, 4294901760
  %136 = vmatpush.xpose.msra.mxu0 %v135
  %v137 = vand.u32 %v85, 4294901760
  %138 = vmatpush.xpose.msra.mxu0 %v137
  %v139 = vand.u32 %v82, 4294901760
  %140 = vmatpush.xpose.msra.mxu0 %v139
  %v141 = vand.u32 %v79, 4294901760
  %142 = vmatpush.xpose.msra.mxu0 %v141
  %v143 = vand.u32 %v76, 4294901760
  %144 = vmatpush.xpose.msra.mxu0 %v143
  %v145 = vand.u32 %v73, 4294901760
  %146 = vmatpush.xpose.msra.mxu0 %v145
  %v147 = vand.u32 %v70, 4294901760
  %148 = vmatpush.xpose.msra.mxu0 %v147
  %v149 = vand.u32 %v61, 4294901760
  %v150 = vsub.f32 %v61, %v149
  %v151 = vand.u32 %v150, 4294901760
  %v152 = vsub.f32 %v150, %v151
  %v153 = vand.u32 %v152, 4294901760
  %154 = vmatmul.f32.gmra.mxu0 %v153
  %v155 = vpop.f32.mrf.mxu0
  %v156 = vadd.f32 %v47, %v155
  %v157 = vand.u32 %v64, 4294901760
  %v158 = vsub.f32 %v64, %v157
  %v159 = vand.u32 %v158, 4294901760
  %v160 = vsub.f32 %v158, %v159
  %v161 = vand.u32 %v160, 4294901760
  %162 = vmatmul.f32.gmra.mxu0 %v161
  %v163 = vpop.f32.mrf.mxu0
  %v164 = vadd.f32 %v52, %v163
  %v165 = vand.u32 %v67, 4294901760
  %v166 = vsub.f32 %v67, %v165
  %v167 = vand.u32 %v166, 4294901760
  %v168 = vsub.f32 %v166, %v167
  %v169 = vand.u32 %v168, 4294901760
  %170 = vmatmul.f32.gmra.mxu0 %v169
  %v171 = vpop.f32.mrf.mxu0
  %v172 = vadd.f32 %v57, %v171
  %173 = vdwg.mxu0
  %v174 = vand.u32 %v115, 4294901760
  %v175 = vsub.f32 %v115, %v174
  %v176 = vand.u32 %v175, 4294901760
  %v177 = vsub.f32 %v175, %v176
  %v178 = vand.u32 %v177, 4294901760
  %179 = vmatpush.xpose.msra.mxu0 %v178
  %v180 = vand.u32 %v112, 4294901760
  %v181 = vsub.f32 %v112, %v180
  %v182 = vand.u32 %v181, 4294901760
  %v183 = vsub.f32 %v181, %v182
  %v184 = vand.u32 %v183, 4294901760
  %185 = vmatpush.xpose.msra.mxu0 %v184
  %v186 = vand.u32 %v109, 4294901760
  %v187 = vsub.f32 %v109, %v186
  %v188 = vand.u32 %v187, 4294901760
  %v189 = vsub.f32 %v187, %v188
  %v190 = vand.u32 %v189, 4294901760
  %191 = vmatpush.xpose.msra.mxu0 %v190
  %v192 = vand.u32 %v106, 4294901760
  %v193 = vsub.f32 %v106, %v192
  %v194 = vand.u32 %v193, 4294901760
  %v195 = vsub.f32 %v193, %v194
  %v196 = vand.u32 %v195, 4294901760
  %197 = vmatpush.xpose.msra.mxu0 %v196
  %v198 = vand.u32 %v103, 4294901760
  %v199 = vsub.f32 %v103, %v198
  %v200 = vand.u32 %v199, 4294901760
  %v201 = vsub.f32 %v199, %v200
  %v202 = vand.u32 %v201, 4294901760
  %203 = vmatpush.xpose.msra.mxu0 %v202
  %v204 = vand.u32 %v100, 4294901760
  %v205 = vsub.f32 %v100, %v204
  %v206 = vand.u32 %v205, 4294901760
  %v207 = vsub.f32 %v205, %v206
  %v208 = vand.u32 %v207, 4294901760
  %209 = vmatpush.xpose.msra.mxu0 %v208
  %v210 = vand.u32 %v97, 4294901760
  %v211 = vsub.f32 %v97, %v210
  %v212 = vand.u32 %v211, 4294901760
  %v213 = vsub.f32 %v211, %v212
  %v214 = vand.u32 %v213, 4294901760
  %215 = vmatpush.xpose.msra.mxu0 %v214
  %v216 = vand.u32 %v94, 4294901760
  %v217 = vsub.f32 %v94, %v216
  %v218 = vand.u32 %v217, 4294901760
  %v219 = vsub.f32 %v217, %v218
  %v220 = vand.u32 %v219, 4294901760
  %221 = vmatpush.xpose.msra.mxu0 %v220
  %v222 = vand.u32 %v91, 4294901760
  %v223 = vsub.f32 %v91, %v222
  %v224 = vand.u32 %v223, 4294901760
  %v225 = vsub.f32 %v223, %v224
  %v226 = vand.u32 %v225, 4294901760
  %227 = vmatpush.xpose.msra.mxu0 %v226
  %v228 = vand.u32 %v88, 4294901760
  %v229 = vsub.f32 %v88, %v228
  %v230 = vand.u32 %v229, 4294901760
  %v231 = vsub.f32 %v229, %v230
  %v232 = vand.u32 %v231, 4294901760
  %233 = vmatpush.xpose.msra.mxu0 %v232
  %v234 = vand.u32 %v85, 4294901760
  %v235 = vsub.f32 %v85, %v234
  %v236 = vand.u32 %v235, 4294901760
  %v237 = vsub.f32 %v235, %v236
  %v238 = vand.u32 %v237, 4294901760
  %239 = vmatpush.xpose.msra.mxu0 %v238
  %v240 = vand.u32 %v82, 4294901760
  %v241 = vsub.f32 %v82, %v240
  %v242 = vand.u32 %v241, 4294901760
  %v243 = vsub.f32 %v241, %v242
  %v244 = vand.u32 %v243, 4294901760
  %245 = vmatpush.xpose.msra.mxu0 %v244
  %v246 = vand.u32 %v79, 4294901760
  %v247 = vsub.f32 %v79, %v246
  %v248 = vand.u32 %v247, 4294901760
  %v249 = vsub.f32 %v247, %v248
  %v250 = vand.u32 %v249, 4294901760
  %251 = vmatpush.xpose.msra.mxu0 %v250
  %v252 = vand.u32 %v76, 4294901760
  %v253 = vsub.f32 %v76, %v252
  %v254 = vand.u32 %v253, 4294901760
  %v255 = vsub.f32 %v253, %v254
  %v256 = vand.u32 %v255, 4294901760
  %257 = vmatpush.xpose.msra.mxu0 %v256
  %v258 = vand.u32 %v73, 4294901760
  %v259 = vsub.f32 %v73, %v258
  %v260 = vand.u32 %v259, 4294901760
  %v261 = vsub.f32 %v259, %v260
  %v262 = vand.u32 %v261, 4294901760
  %263 = vmatpush.xpose.msra.mxu0 %v262
  %v264 = vand.u32 %v70, 4294901760
  %v265 = vsub.f32 %v70, %v264
  %v266 = vand.u32 %v265, 4294901760
  %v267 = vsub.f32 %v265, %v266
  %v268 = vand.u32 %v267, 4294901760
  %269 = vmatpush.xpose.msra.mxu0 %v268
  %v270 = vand.u32 %v61, 4294901760
  %271 = vmatmul.f32.gmra.mxu0 %v270
  %v272 = vpop.f32.mrf.mxu0
  %v273 = vadd.f32 %v156, %v272
  %v274 = vand.u32 %v64, 4294901760
  %275 = vmatmul.f32.gmra.mxu0 %v274
  %v276 = vpop.f32.mrf.mxu0
  %v277 = vadd.f32 %v164, %v276
  %v278 = vand.u32 %v67, 4294901760
  %279 = vmatmul.f32.gmra.mxu0 %v278
  %v280 = vpop.f32.mrf.mxu0
  %v281 = vadd.f32 %v172, %v280
  %282 = vdwg.mxu0
  %v283 = vand.u32 %v115, 4294901760
  %v284 = vsub.f32 %v115, %v283
  %285 = vmatpush.xpose.msra.mxu0 %v284
  %v286 = vand.u32 %v112, 4294901760
  %v287 = vsub.f32 %v112, %v286
  %288 = vmatpush.xpose.msra.mxu0 %v287
  %v289 = vand.u32 %v109, 4294901760
  %v290 = vsub.f32 %v109, %v289
  %291 = vmatpush.xpose.msra.mxu0 %v290
  %v292 = vand.u32 %v106, 4294901760
  %v293 = vsub.f32 %v106, %v292
  %294 = vmatpush.xpose.msra.mxu0 %v293
  %v295 = vand.u32 %v103, 4294901760
  %v296 = vsub.f32 %v103, %v295
  %297 = vmatpush.xpose.msra.mxu0 %v296
  %v298 = vand.u32 %v100, 4294901760
  %v299 = vsub.f32 %v100, %v298
  %300 = vmatpush.xpose.msra.mxu0 %v299
  %v301 = vand.u32 %v97, 4294901760
  %v302 = vsub.f32 %v97, %v301
  %303 = vmatpush.xpose.msra.mxu0 %v302
  %v304 = vand.u32 %v94, 4294901760
  %v305 = vsub.f32 %v94, %v304
  %306 = vmatpush.xpose.msra.mxu0 %v305
  %v307 = vand.u32 %v91, 4294901760
  %v308 = vsub.f32 %v91, %v307
  %309 = vmatpush.xpose.msra.mxu0 %v308
  %v310 = vand.u32 %v88, 4294901760
  %v311 = vsub.f32 %v88, %v310
  %312 = vmatpush.xpose.msra.mxu0 %v311
  %v313 = vand.u32 %v85, 4294901760
  %v314 = vsub.f32 %v85, %v313
  %315 = vmatpush.xpose.msra.mxu0 %v314
  %v316 = vand.u32 %v82, 4294901760
  %v317 = vsub.f32 %v82, %v316
  %318 = vmatpush.xpose.msra.mxu0 %v317
  %v319 = vand.u32 %v79, 4294901760
  %v320 = vsub.f32 %v79, %v319
  %321 = vmatpush.xpose.msra.mxu0 %v320
  %v322 = vand.u32 %v76, 4294901760
  %v323 = vsub.f32 %v76, %v322
  %324 = vmatpush.xpose.msra.mxu0 %v323
  %v325 = vand.u32 %v73, 4294901760
  %v326 = vsub.f32 %v73, %v325
  %327 = vmatpush.xpose.msra.mxu0 %v326
  %v328 = vand.u32 %v70, 4294901760
  %v329 = vsub.f32 %v70, %v328
  %330 = vmatpush.xpose.msra.mxu0 %v329
  %v331 = vand.u32 %v61, 4294901760
  %v332 = vsub.f32 %v61, %v331
  %333 = vmatmul.f32.gmra.mxu0 %v332
  %v334 = vpop.f32.mrf.mxu0
  %v335 = vadd.f32 %v273, %v334
  %v336 = vand.u32 %v64, 4294901760
  %v337 = vsub.f32 %v64, %v336
  %338 = vmatmul.f32.gmra.mxu0 %v337
  %v339 = vpop.f32.mrf.mxu0
  %v340 = vadd.f32 %v277, %v339
  %v341 = vand.u32 %v67, 4294901760
  %v342 = vsub.f32 %v67, %v341
  %343 = vmatmul.f32.gmra.mxu0 %v342
  %v344 = vpop.f32.mrf.mxu0
  %v345 = vadd.f32 %v281, %v344
  %346 = vdwg.mxu0
  %v347 = vand.u32 %v115, 4294901760
  %348 = vmatpush.xpose.msra.mxu0 %v347
  %v349 = vand.u32 %v112, 4294901760
  %350 = vmatpush.xpose.msra.mxu0 %v349
  %v351 = vand.u32 %v109, 4294901760
  %352 = vmatpush.xpose.msra.mxu0 %v351
  %v353 = vand.u32 %v106, 4294901760
  %354 = vmatpush.xpose.msra.mxu0 %v353
  %v355 = vand.u32 %v103, 4294901760
  %356 = vmatpush.xpose.msra.mxu0 %v355
  %v357 = vand.u32 %v100, 4294901760
  %358 = vmatpush.xpose.msra.mxu0 %v357
  %v359 = vand.u32 %v97, 4294901760
  %360 = vmatpush.xpose.msra.mxu0 %v359
  %v361 = vand.u32 %v94, 4294901760
  %362 = vmatpush.xpose.msra.mxu0 %v361
  %v363 = vand.u32 %v91, 4294901760
  %364 = vmatpush.xpose.msra.mxu0 %v363
  %v365 = vand.u32 %v88, 4294901760
  %366 = vmatpush.xpose.msra.mxu0 %v365
  %v367 = vand.u32 %v85, 4294901760
  %368 = vmatpush.xpose.msra.mxu0 %v367
  %v369 = vand.u32 %v82, 4294901760
  %370 = vmatpush.xpose.msra.mxu0 %v369
  %v371 = vand.u32 %v79, 4294901760
  %372 = vmatpush.xpose.msra.mxu0 %v371
  %v373 = vand.u32 %v76, 4294901760
  %374 = vmatpush.xpose.msra.mxu0 %v373
  %v375 = vand.u32 %v73, 4294901760
  %376 = vmatpush.xpose.msra.mxu0 %v375
  %v377 = vand.u32 %v70, 4294901760
  %378 = vmatpush.xpose.msra.mxu0 %v377
  %v379 = vand.u32 %v61, 4294901760
  %v380 = vsub.f32 %v61, %v379
  %v381 = vand.u32 %v380, 4294901760
  %382 = vmatmul.f32.gmra.mxu0 %v381
  %v383 = vpop.f32.mrf.mxu0
  %v384 = vadd.f32 %v335, %v383
  %v385 = vand.u32 %v64, 4294901760
  %v386 = vsub.f32 %v64, %v385
  %v387 = vand.u32 %v386, 4294901760
  %388 = vmatmul.f32.gmra.mxu0 %v387
  %v389 = vpop.f32.mrf.mxu0
  %v390 = vadd.f32 %v340, %v389
  %v391 = vand.u32 %v67, 4294901760
  %v392 = vsub.f32 %v67, %v391
  %v393 = vand.u32 %v392, 4294901760
  %394 = vmatmul.f32.gmra.mxu0 %v393
  %v395 = vpop.f32.mrf.mxu0
  %v396 = vadd.f32 %v345, %v395
  %397 = vdwg.mxu0
  %v398 = vand.u32 %v115, 4294901760
  %v399 = vsub.f32 %v115, %v398
  %v400 = vand.u32 %v399, 4294901760
  %401 = vmatpush.xpose.msra.mxu0 %v400
  %v402 = vand.u32 %v112, 4294901760
  %v403 = vsub.f32 %v112, %v402
  %v404 = vand.u32 %v403, 4294901760
  %405 = vmatpush.xpose.msra.mxu0 %v404
  %v406 = vand.u32 %v109, 4294901760
  %v407 = vsub.f32 %v109, %v406
  %v408 = vand.u32 %v407, 4294901760
  %409 = vmatpush.xpose.msra.mxu0 %v408
  %v410 = vand.u32 %v106, 4294901760
  %v411 = vsub.f32 %v106, %v410
  %v412 = vand.u32 %v411, 4294901760
  %413 = vmatpush.xpose.msra.mxu0 %v412
  %v414 = vand.u32 %v103, 4294901760
  %v415 = vsub.f32 %v103, %v414
  %v416 = vand.u32 %v415, 4294901760
  %417 = vmatpush.xpose.msra.mxu0 %v416
  %v418 = vand.u32 %v100, 4294901760
  %v419 = vsub.f32 %v100, %v418
  %v420 = vand.u32 %v419, 4294901760
  %421 = vmatpush.xpose.msra.mxu0 %v420
  %v422 = vand.u32 %v97, 4294901760
  %v423 = vsub.f32 %v97, %v422
  %v424 = vand.u32 %v423, 4294901760
  %425 = vmatpush.xpose.msra.mxu0 %v424
  %v426 = vand.u32 %v94, 4294901760
  %v427 = vsub.f32 %v94, %v426
  %v428 = vand.u32 %v427, 4294901760
  %429 = vmatpush.xpose.msra.mxu0 %v428
  %v430 = vand.u32 %v91, 4294901760
  %v431 = vsub.f32 %v91, %v430
  %v432 = vand.u32 %v431, 4294901760
  %433 = vmatpush.xpose.msra.mxu0 %v432
  %v434 = vand.u32 %v88, 4294901760
  %v435 = vsub.f32 %v88, %v434
  %v436 = vand.u32 %v435, 4294901760
  %437 = vmatpush.xpose.msra.mxu0 %v436
  %v438 = vand.u32 %v85, 4294901760
  %v439 = vsub.f32 %v85, %v438
  %v440 = vand.u32 %v439, 4294901760
  %441 = vmatpush.xpose.msra.mxu0 %v440
  %v442 = vand.u32 %v82, 4294901760
  %v443 = vsub.f32 %v82, %v442
  %v444 = vand.u32 %v443, 4294901760
  %445 = vmatpush.xpose.msra.mxu0 %v444
  %v446 = vand.u32 %v79, 4294901760
  %v447 = vsub.f32 %v79, %v446
  %v448 = vand.u32 %v447, 4294901760
  %449 = vmatpush.xpose.msra.mxu0 %v448
  %v450 = vand.u32 %v76, 4294901760
  %v451 = vsub.f32 %v76, %v450
  %v452 = vand.u32 %v451, 4294901760
  %453 = vmatpush.xpose.msra.mxu0 %v452
  %v454 = vand.u32 %v73, 4294901760
  %v455 = vsub.f32 %v73, %v454
  %v456 = vand.u32 %v455, 4294901760
  %457 = vmatpush.xpose.msra.mxu0 %v456
  %v458 = vand.u32 %v70, 4294901760
  %v459 = vsub.f32 %v70, %v458
  %v460 = vand.u32 %v459, 4294901760
  %461 = vmatpush.xpose.msra.mxu0 %v460
  %v462 = vand.u32 %v61, 4294901760
  %463 = vmatmul.f32.gmra.mxu0 %v462
  %v464 = vpop.f32.mrf.mxu0
  %v465 = vadd.f32 %v384, %v464
  %v466 = vand.u32 %v64, 4294901760
  %467 = vmatmul.f32.gmra.mxu0 %v466
  %v468 = vpop.f32.mrf.mxu0
  %v469 = vadd.f32 %v390, %v468
  %v470 = vand.u32 %v67, 4294901760
  %471 = vmatmul.f32.gmra.mxu0 %v470
  %v472 = vpop.f32.mrf.mxu0
  %v473 = vadd.f32 %v396, %v472
  %474 = vdwg.mxu0
  %v475 = vand.u32 %v115, 4294901760
  %476 = vmatpush.xpose.msra.mxu0 %v475
  %v477 = vand.u32 %v112, 4294901760
  %478 = vmatpush.xpose.msra.mxu0 %v477
  %v479 = vand.u32 %v109, 4294901760
  %480 = vmatpush.xpose.msra.mxu0 %v479
  %v481 = vand.u32 %v106, 4294901760
  %482 = vmatpush.xpose.msra.mxu0 %v481
  %v483 = vand.u32 %v103, 4294901760
  %484 = vmatpush.xpose.msra.mxu0 %v483
  %v485 = vand.u32 %v100, 4294901760
  %486 = vmatpush.xpose.msra.mxu0 %v485
  %v487 = vand.u32 %v97, 4294901760
  %488 = vmatpush.xpose.msra.mxu0 %v487
  %v489 = vand.u32 %v94, 4294901760
  %490 = vmatpush.xpose.msra.mxu0 %v489
  %v491 = vand.u32 %v91, 4294901760
  %492 = vmatpush.xpose.msra.mxu0 %v491
  %v493 = vand.u32 %v88, 4294901760
  %494 = vmatpush.xpose.msra.mxu0 %v493
  %v495 = vand.u32 %v85, 4294901760
  %496 = vmatpush.xpose.msra.mxu0 %v495
  %v497 = vand.u32 %v82, 4294901760
  %498 = vmatpush.xpose.msra.mxu0 %v497
  %v499 = vand.u32 %v79, 4294901760
  %500 = vmatpush.xpose.msra.mxu0 %v499
  %v501 = vand.u32 %v76, 4294901760
  %502 = vmatpush.xpose.msra.mxu0 %v501
  %v503 = vand.u32 %v73, 4294901760
  %504 = vmatpush.xpose.msra.mxu0 %v503
  %v505 = vand.u32 %v70, 4294901760
  %506 = vmatpush.xpose.msra.mxu0 %v505
  %v507 = vand.u32 %v61, 4294901760
  %508 = vmatmul.f32.gmra.mxu0 %v507
  %v509 = vpop.f32.mrf.mxu0
  %v510 = vadd.f32 %v465, %v509
  %v511 = vand.u32 %v64, 4294901760
  %512 = vmatmul.f32.gmra.mxu0 %v511
  %v513 = vpop.f32.mrf.mxu0
  %v514 = vadd.f32 %v469, %v513
  %v515 = vand.u32 %v67, 4294901760
  %516 = vmatmul.f32.gmra.mxu0 %v515
  %v517 = vpop.f32.mrf.mxu0
  %v518 = vadd.f32 %v473, %v517
  %519 = vdwg.mxu0
  %v520 = vmul.f32 %v510, 0.5
  %v521 = vmul.f32 %v514, 0.5
  %v522 = vmul.f32 %v518, 0.5
  %v523 = vmul.f32 %v510, 0.70710677
  %v524 = vmul.f32 %v514, 0.70710677
  %v525 = vmul.f32 %v518, 0.70710677
  %v526 = vmul.f32 %v523, %v523
  %v527 = vmin.f32 16.0, %v526
  %v528 = vmul.f32 %v527, 2.1237322e-06
  %v529 = vadd.f32 %v528, 0.00028619796
  %v530 = vmul.f32 %v527, %v529
  %v531 = vadd.f32 %v530, 0.0036580483
  %v532 = vmul.f32 %v527, %v531
  %v533 = vadd.f32 %v532, 0.05243302
  %v534 = vmul.f32 %v527, %v533
  %v535 = vadd.f32 %v534, 0.18741608
  %v536 = vmul.f32 %v527, %v535
  %v537 = vadd.f32 %v536, 1.1283791
  %v538 = vmul.f32 %v523, %v537
  %v539 = vmul.f32 %v527, 3.8918573e-05
  %v540 = vadd.f32 %v539, 0.001143296
  %v541 = vmul.f32 %v527, %v540
  %v542 = vadd.f32 %v541, 0.014752088
  %v543 = vmul.f32 %v527, %v542
  %v544 = vadd.f32 %v543, 0.112945676
  %v545 = vmul.f32 %v527, %v544
  %v546 = vadd.f32 %v545, 0.4994258
  %v547 = vmul.f32 %v527, %v546
  %v548 = vadd.f32 %v547, 1.0
  %v549 = vrcp.pop %v548
  %v550 = vmul.f32 %v548, %v549
  %v551 = vsub.f32 1.0, %v550
  %v552 = vmul.f32 %v549, %v551
  %v553 = vadd.f32 %v549, %v552
  %vm554 = vweird.f32 %v548
  %vm555 = vweird.f32 %v549
  %vm556 = vmor %vm554, %vm555
  %v557 = vsel %vm556, %v549, %v553
  %v558 = vand.u32 2147483647, %v548
  %vm559 = vcmp.eq.f32.partialorder %v558, 8.507059e+37
  %v560 = vand.u32 %v548, 2147483648
  %v561 = vor.u32 1.1754944e-38, %v560
  %v562 = vsel %vm559, %v561, %v557
  %v563 = vmul.f32 %v538, %v562
  %v564 = vmin.f32 %v563, 1.0
  %v565 = vmax.f32 %v564, -1.0
  %v566 = vmul.f32 %v524, %v524
  %v567 = vmin.f32 16.0, %v566
  %v568 = vmul.f32 %v567, 2.1237322e-06
  %v569 = vadd.f32 %v568, 0.00028619796
  %v570 = vmul.f32 %v567, %v569
  %v571 = vadd.f32 %v570, 0.0036580483
  %v572 = vmul.f32 %v567, %v571
  %v573 = vadd.f32 %v572, 0.05243302
  %v574 = vmul.f32 %v567, %v573
  %v575 = vadd.f32 %v574, 0.18741608
  %v576 = vmul.f32 %v567, %v575
  %v577 = vadd.f32 %v576, 1.1283791
  %v578 = vmul.f32 %v524, %v577
  %v579 = vmul.f32 %v567, 3.8918573e-05
  %v580 = vadd.f32 %v579, 0.001143296
  %v581 = vmul.f32 %v567, %v580
  %v582 = vadd.f32 %v581, 0.014752088
  %v583 = vmul.f32 %v567, %v582
  %v584 = vadd.f32 %v583, 0.112945676
  %v585 = vmul.f32 %v567, %v584
  %v586 = vadd.f32 %v585, 0.4994258
  %v587 = vmul.f32 %v567, %v586
  %v588 = vadd.f32 %v587, 1.0
  %v589 = vrcp.pop %v588
  %v590 = vmul.f32 %v588, %v589
  %v591 = vsub.f32 1.0, %v590
  %v592 = vmul.f32 %v589, %v591
  %v593 = vadd.f32 %v589, %v592
  %vm594 = vweird.f32 %v588
  %vm595 = vweird.f32 %v589
  %vm596 = vmor %vm594, %vm595
  %v597 = vsel %vm596, %v589, %v593
  %v598 = vand.u32 2147483647, %v588
  %vm599 = vcmp.eq.f32.partialorder %v598, 8.507059e+37
  %v600 = vand.u32 %v588, 2147483648
  %v601 = vor.u32 1.1754944e-38, %v600
  %v602 = vsel %vm599, %v601, %v597
  %v603 = vmul.f32 %v578, %v602
  %v604 = vmin.f32 %v603, 1.0
  %v605 = vmax.f32 %v604, -1.0
  %v606 = vmul.f32 %v525, %v525
  %v607 = vmin.f32 16.0, %v606
  %v608 = vmul.f32 %v607, 2.1237322e-06
  %v609 = vadd.f32 %v608, 0.00028619796
  %v610 = vmul.f32 %v607, %v609
  %v611 = vadd.f32 %v610, 0.0036580483
  %v612 = vmul.f32 %v607, %v611
  %v613 = vadd.f32 %v612, 0.05243302
  %v614 = vmul.f32 %v607, %v613
  %v615 = vadd.f32 %v614, 0.18741608
  %v616 = vmul.f32 %v607, %v615
  %v617 = vadd.f32 %v616, 1.1283791
  %v618 = vmul.f32 %v525, %v617
  %v619 = vmul.f32 %v607, 3.8918573e-05
  %v620 = vadd.f32 %v619, 0.001143296
  %v621 = vmul.f32 %v607, %v620
  %v622 = vadd.f32 %v621, 0.014752088
  %v623 = vmul.f32 %v607, %v622
  %v624 = vadd.f32 %v623, 0.112945676
  %v625 = vmul.f32 %v607, %v624
  %v626 = vadd.f32 %v625, 0.4994258
  %v627 = vmul.f32 %v607, %v626
  %v628 = vadd.f32 %v627, 1.0
  %v629 = vrcp.pop %v628
  %v630 = vmul.f32 %v628, %v629
  %v631 = vsub.f32 1.0, %v630
  %v632 = vmul.f32 %v629, %v631
  %v633 = vadd.f32 %v629, %v632
  %vm634 = vweird.f32 %v628
  %vm635 = vweird.f32 %v629
  %vm636 = vmor %vm634, %vm635
  %v637 = vsel %vm636, %v629, %v633
  %v638 = vand.u32 2147483647, %v628
  %vm639 = vcmp.eq.f32.partialorder %v638, 8.507059e+37
  %v640 = vand.u32 %v628, 2147483648
  %v641 = vor.u32 1.1754944e-38, %v640
  %v642 = vsel %vm639, %v641, %v637
  %v643 = vmul.f32 %v618, %v642
  %v644 = vmin.f32 %v643, 1.0
  %v645 = vmax.f32 %v644, -1.0
  %v646 = vadd.f32 %v565, 1.0
  %v647 = vadd.f32 %v605, 1.0
  %v648 = vadd.f32 %v645, 1.0
  %v649 = vmul.f32 %v520, %v646
  %v650 = vmul.f32 %v521, %v647
  %v651 = vmul.f32 %v522, %v648
  %v652 = vld [vmem:[%s3] sm:$0x1]
  %v653 = vld [vmem:[#allocation2] sm:$0x1]
  %655 = vset.pattern.permute.xlu0 0
  %656 = vperm.xlu0 %655, %v653
  %v657 = vpop.permute.xlu0 %656
  %v659 = vperm.slane %v657, 0
  %vm660 = vcmask 162816
  %v662 = vsel %vm660, %v652, 0
  %vm664 = vcmask 1043456
  %v666 = vsel %vm664, %v651, 0
  %668 = vmatpush.msra.mxu0 0.0
  %669 = vmatpush.msra.mxu0 0.0
  %670 = vmatpush.msra.mxu0 0.0
  %671 = vmatpush.msra.mxu0 0.0
  %672 = vmatpush.msra.mxu0 0.0
  %673 = vmatpush.msra.mxu0 0.0
  %674 = vmatpush.msra.mxu0 0.0
  %675 = vmatpush.msra.mxu0 0.0
  %676 = vmatpush.msra.mxu0 0.0
  %677 = vmatpush.msra.mxu0 0.0
  %678 = vmatpush.msra.mxu0 0.0
  %679 = vmatpush.msra.mxu0 0.0
  %680 = vmatpush.msra.mxu0 0.0
  %v681 = vand.u32 %v666, 4294901760
  %682 = vmatpush.msra.mxu0 %v681
  %v683 = vand.u32 %v650, 4294901760
  %684 = vmatpush.msra.mxu0 %v683
  %v685 = vand.u32 %v649, 4294901760
  %686 = vmatpush.msra.mxu0 %v685
  %v687 = vand.u32 %v662, 4294901760
  %v688 = vsub.f32 %v662, %v687
  %v689 = vand.u32 %v688, 4294901760
  %v690 = vsub.f32 %v688, %v689
  %v691 = vand.u32 %v690, 4294901760
  %692 = vmatmul.f32.gmra.mxu0 %v691
  %v693 = vpop.f32.mrf.mxu0
  %v694 = vadd.f32 %v659, %v693
  %695 = vdwg.mxu0
  %696 = vmatpush.msra.mxu0 0.0
  %697 = vmatpush.msra.mxu0 0.0
  %698 = vmatpush.msra.mxu0 0.0
  %699 = vmatpush.msra.mxu0 0.0
  %700 = vmatpush.msra.mxu0 0.0
  %701 = vmatpush.msra.mxu0 0.0
  %702 = vmatpush.msra.mxu0 0.0
  %703 = vmatpush.msra.mxu0 0.0
  %704 = vmatpush.msra.mxu0 0.0
  %705 = vmatpush.msra.mxu0 0.0
  %706 = vmatpush.msra.mxu0 0.0
  %707 = vmatpush.msra.mxu0 0.0
  %708 = vmatpush.msra.mxu0 0.0
  %v709 = vand.u32 %v666, 4294901760
  %v710 = vsub.f32 %v666, %v709
  %v711 = vand.u32 %v710, 4294901760
  %v712 = vsub.f32 %v710, %v711
  %v713 = vand.u32 %v712, 4294901760
  %714 = vmatpush.msra.mxu0 %v713
  %v715 = vand.u32 %v650, 4294901760
  %v716 = vsub.f32 %v650, %v715
  %v717 = vand.u32 %v716, 4294901760
  %v718 = vsub.f32 %v716, %v717
  %v719 = vand.u32 %v718, 4294901760
  %720 = vmatpush.msra.mxu0 %v719
  %v721 = vand.u32 %v649, 4294901760
  %v722 = vsub.f32 %v649, %v721
  %v723 = vand.u32 %v722, 4294901760
  %v724 = vsub.f32 %v722, %v723
  %v725 = vand.u32 %v724, 4294901760
  %726 = vmatpush.msra.mxu0 %v725
  %v727 = vand.u32 %v662, 4294901760
  %728 = vmatmul.f32.gmra.mxu0 %v727
  %v729 = vpop.f32.mrf.mxu0
  %v730 = vadd.f32 %v694, %v729
  %731 = vdwg.mxu0
  %732 = vmatpush.msra.mxu0 0.0
  %733 = vmatpush.msra.mxu0 0.0
  %734 = vmatpush.msra.mxu0 0.0
  %735 = vmatpush.msra.mxu0 0.0
  %736 = vmatpush.msra.mxu0 0.0
  %737 = vmatpush.msra.mxu0 0.0
  %738 = vmatpush.msra.mxu0 0.0
  %739 = vmatpush.msra.mxu0 0.0
  %740 = vmatpush.msra.mxu0 0.0
  %741 = vmatpush.msra.mxu0 0.0
  %742 = vmatpush.msra.mxu0 0.0
  %743 = vmatpush.msra.mxu0 0.0
  %744 = vmatpush.msra.mxu0 0.0
  %v745 = vand.u32 %v666, 4294901760
  %v746 = vsub.f32 %v666, %v745
  %747 = vmatpush.msra.mxu0 %v746
  %v748 = vand.u32 %v650, 4294901760
  %v749 = vsub.f32 %v650, %v748
  %750 = vmatpush.msra.mxu0 %v749
  %v751 = vand.u32 %v649, 4294901760
  %v752 = vsub.f32 %v649, %v751
  %753 = vmatpush.msra.mxu0 %v752
  %v754 = vand.u32 %v662, 4294901760
  %v755 = vsub.f32 %v662, %v754
  %756 = vmatmul.f32.gmra.mxu0 %v755
  %v757 = vpop.f32.mrf.mxu0
  %v758 = vadd.f32 %v730, %v757
  %759 = vdwg.mxu0
  %760 = vmatpush.msra.mxu0 0.0
  %761 = vmatpush.msra.mxu0 0.0
  %762 = vmatpush.msra.mxu0 0.0
  %763 = vmatpush.msra.mxu0 0.0
  %764 = vmatpush.msra.mxu0 0.0
  %765 = vmatpush.msra.mxu0 0.0
  %766 = vmatpush.msra.mxu0 0.0
  %767 = vmatpush.msra.mxu0 0.0
  %768 = vmatpush.msra.mxu0 0.0
  %769 = vmatpush.msra.mxu0 0.0
  %770 = vmatpush.msra.mxu0 0.0
  %771 = vmatpush.msra.mxu0 0.0
  %772 = vmatpush.msra.mxu0 0.0
  %v773 = vand.u32 %v666, 4294901760
  %774 = vmatpush.msra.mxu0 %v773
  %v775 = vand.u32 %v650, 4294901760
  %776 = vmatpush.msra.mxu0 %v775
  %v777 = vand.u32 %v649, 4294901760
  %778 = vmatpush.msra.mxu0 %v777
  %v779 = vand.u32 %v662, 4294901760
  %v780 = vsub.f32 %v662, %v779
  %v781 = vand.u32 %v780, 4294901760
  %782 = vmatmul.f32.gmra.mxu0 %v781
  %v783 = vpop.f32.mrf.mxu0
  %v784 = vadd.f32 %v758, %v783
  %785 = vdwg.mxu0
  %786 = vmatpush.msra.mxu0 0.0
  %787 = vmatpush.msra.mxu0 0.0
  %788 = vmatpush.msra.mxu0 0.0
  %789 = vmatpush.msra.mxu0 0.0
  %790 = vmatpush.msra.mxu0 0.0
  %791 = vmatpush.msra.mxu0 0.0
  %792 = vmatpush.msra.mxu0 0.0
  %793 = vmatpush.msra.mxu0 0.0
  %794 = vmatpush.msra.mxu0 0.0
  %795 = vmatpush.msra.mxu0 0.0
  %796 = vmatpush.msra.mxu0 0.0
  %797 = vmatpush.msra.mxu0 0.0
  %798 = vmatpush.msra.mxu0 0.0
  %v799 = vand.u32 %v666, 4294901760
  %v800 = vsub.f32 %v666, %v799
  %v801 = vand.u32 %v800, 4294901760
  %802 = vmatpush.msra.mxu0 %v801
  %v803 = vand.u32 %v650, 4294901760
  %v804 = vsub.f32 %v650, %v803
  %v805 = vand.u32 %v804, 4294901760
  %806 = vmatpush.msra.mxu0 %v805
  %v807 = vand.u32 %v649, 4294901760
  %v808 = vsub.f32 %v649, %v807
  %v809 = vand.u32 %v808, 4294901760
  %810 = vmatpush.msra.mxu0 %v809
  %v811 = vand.u32 %v662, 4294901760
  %812 = vmatmul.f32.gmra.mxu0 %v811
  %v813 = vpop.f32.mrf.mxu0
  %v814 = vadd.f32 %v784, %v813
  %815 = vdwg.mxu0
  %816 = vmatpush.msra.mxu0 0.0
  %817 = vmatpush.msra.mxu0 0.0
  %818 = vmatpush.msra.mxu0 0.0
  %819 = vmatpush.msra.mxu0 0.0
  %820 = vmatpush.msra.mxu0 0.0
  %821 = vmatpush.msra.mxu0 0.0
  %822 = vmatpush.msra.mxu0 0.0
  %823 = vmatpush.msra.mxu0 0.0
  %824 = vmatpush.msra.mxu0 0.0
  %825 = vmatpush.msra.mxu0 0.0
  %826 = vmatpush.msra.mxu0 0.0
  %827 = vmatpush.msra.mxu0 0.0
  %828 = vmatpush.msra.mxu0 0.0
  %v829 = vand.u32 %v666, 4294901760
  %830 = vmatpush.msra.mxu0 %v829
  %v831 = vand.u32 %v650, 4294901760
  %832 = vmatpush.msra.mxu0 %v831
  %v833 = vand.u32 %v649, 4294901760
  %834 = vmatpush.msra.mxu0 %v833
  %v835 = vand.u32 %v662, 4294901760
  %836 = vmatmul.f32.gmra.mxu0 %v835
  %v837 = vpop.f32.mrf.mxu0
  %v838 = vadd.f32 %v814, %v837
  %839 = vdwg.mxu0
  %840 = vst [vmem:[%s5] sm:$0x1] %v838
  // Predicated region
  $region22: #{test_network_forward.1} parent=0 // pred_check
    _
  $region23: #{test_network_forward.1} parent=0 // pred_check_branch
    %842 = sbr.rel (0) target = $region25
  $region24: #{test_network_forward.1} parent=0 // pred_region
    _
  $region25: #{test_network_forward.1} parent=0 // pred_fallthru
    _
  // Predicated region
  $region26: #{test_network_forward.1} parent=0 // pred_check
    _
  $region27: #{test_network_forward.1} parent=0 // pred_check_branch
    %844 = sbr.rel (0) target = $region29
  $region28: #{test_network_forward.1} parent=0 // pred_region
    _
  $region29: #{test_network_forward.1} parent=0 // pred_fallthru
    _

</llo_original>
